<compile_context>
chip_gen: v5e
topology: v5e:2x2
jax: 0.10.0
libtpu: 0.0.40
codegen_flags: <defaults>
</compile_context>

<pallas_src>
import jax
import jax.numpy as jnp
from jax.experimental import pallas as pl
from jax.experimental.pallas import tpu as pltpu

_LANE = 128


def _round_up(x, m):
    return ((x + m - 1) // m) * m


def _sublane(dtype):
    # 8 rows for 4-byte dtypes, 16 for bf16, 32 for 1-byte dtypes
    return max(8, 32 // jnp.dtype(dtype).itemsize)


def _vmem_capacity_bytes():
    try:
        return int(pltpu.get_tpu_info().vmem_capacity_bytes)
    except Exception:
        return 64 * 1024 * 1024  # conservative (v7x per-TC physical)


# ---------------------------------------------------------------------------
# Kernels
# ---------------------------------------------------------------------------
def _sentiment_attn_kernel(x_ref, smask_ref, w1_ref, b1_ref, w2_ref, b2_ref,
                           wc_ref, bc_ref, o_ref):
    """BT batch elements per grid step.

    x_ref    : (BT, Sp, D)  features (S padded to sublane multiple)
    smask_ref: (Sp, 1)      additive softmax mask (0 real rows, -1e30 padded)
    w1_ref   : (D, H)       attention layer-1 weight (in, out)
    b1_ref   : (1, H)
    w2_ref   : (1, H)       attention layer-2 weight as a row (VPU reduce)
    b2_ref   : (1, 1)
    wc_ref   : (D, Cp)      classifier weight, zero-padded lane-dense
    bc_ref   : (1, Cp)
    o_ref    : (BT, Sp, Cp) padded logits (sliced to (S, C) outside)
    """
    BT, Sp, D = x_ref.shape
    H = w1_ref.shape[1]
    Cp = o_ref.shape[2]

    x3 = x_ref[...]                          # native dtype; MXU accumulates f32
    x2 = x3.reshape(BT * Sp, D)              # free view (Sp sublane-aligned)

    # attention MLP: Linear(D -> H) + tanh, f32 accumulate on the MXU
    h2 = jnp.tanh(jnp.dot(x2, w1_ref[...], preferred_element_type=jnp.float32)
                  + b1_ref[...])             # (BT*Sp, H) f32
    h3 = h2.reshape(BT, Sp, H)

    # scores: VPU multiply + XLU lane reduction (avoids an N=1 MXU matmul).
    scores = (jnp.sum(h3 * w2_ref[...], axis=-1, keepdims=True)
              + b2_ref[...] + smask_ref[...])          # (BT, Sp, 1) f32

    # softmax over the sequence axis (PyTorch dim=1), f32, exact reciprocal
    # (denominator is (BT,1,1) -> exact division is free, better numerics).
    m = jnp.max(scores, axis=1, keepdims=True)         # (BT, 1, 1)
    e = jnp.exp(scores - m)                            # (BT, Sp, 1)
    attn = e / jnp.sum(e, axis=1, keepdims=True)       # (BT, Sp, 1)

    # classifier folded with the attention scaling:
    #   (attn * x) @ wc + bc == attn * (x @ wc) + bc   (attn is per-row scalar)
    z = jnp.dot(x2, wc_ref[...], preferred_element_type=jnp.float32)
    out = attn * z.reshape(BT, Sp, Cp) + bc_ref[...]   # (BT, Sp, Cp) f32
    o_ref[...] = out.astype(o_ref.dtype)


def _sentiment_plain_kernel(x_ref, wc_ref, bc_ref, o_ref):
    """use_attention=False: row-tiled (TM, D) @ (D, Cp), lane-dense output."""
    o_ref[...] = (jnp.dot(x_ref[...], wc_ref[...],
                          preferred_element_type=jnp.float32)
                  + bc_ref[...]).astype(o_ref.dtype)


# ---------------------------------------------------------------------------
# Wrapper
# ---------------------------------------------------------------------------
def sentiment_head(features, params, *, use_attention):
    """features: (B, S, D) -> logits (B, S, C). Mirrors SentimentAnalysisHead."""
    B, S, D = features.shape
    out_dtype = features.dtype
    isz = jnp.dtype(features.dtype).itemsize
    C = params["wc"].shape[1]
    Cp = _round_up(C, _LANE)                 # lane-dense classifier output

    # Cast params to the activation dtype so bf16 activations run the fast
    # bf16 MXU path (no-op for f32 activations).
    cast = lambda a: a.astype(features.dtype)
    wc_pad = jnp.pad(cast(params["wc"]), ((0, 0), (0, Cp - C)))
    bc_pad = jnp.pad(cast(params["bc"]), ((0, 0), (0, Cp - C)))

    vmem_cap = _vmem_capacity_bytes()
    vmem_limit = min(vmem_cap * 3 // 4, 96 * 1024 * 1024)   # ~48 MiB v7x, ~96 MiB v5e/v6e
    m_cap = 2048 if vmem_cap >= 96 * 1024 * 1024 else 1024  # rows per grid step

    if use_attention:
        H = params["w1"].shape[1]
        w1 = cast(params["w1"])
        b1 = cast(params["b1"])
        w2_row = cast(params["w2"]).reshape(1, H)
        b2 = cast(params["b2"])

        # Pad S to a sublane multiple so the in-kernel reshape is a free view;
        # padded rows are excluded from the softmax via an additive -1e30 mask.
        sub = _sublane(features.dtype)
        Sp = _round_up(S, sub)
        x = features if Sp == S else jnp.pad(features, ((0, 0), (0, Sp - S), (0, 0)))
        smask = jnp.where(jnp.arange(Sp)[:, None] < S, 0.0, -1e30).astype(jnp.float32)

        # VMEM-honest sizing: double-buffered x/out blocks + double-buffered
        # weights + f32 intermediates (tanh activations, classifier acc).
        weight_bytes = 2 * isz * (D * H + 2 * H + 1 + D * Cp + Cp) + 2 * 4 * Sp
        per_bt = Sp * (2 * D * isz + 2 * Cp * isz + 4 * H + 4 * Cp + 32)
        budget = max(per_bt, vmem_limit - weight_bytes - (2 << 20))
        bt = max(1, budget // per_bt)
        bt = min(bt, max(1, m_cap // Sp))     # bound MXU M rows per step
        bt = min(bt, max(1, -(-B // 2)))      # >=2 grid steps -> both v7x TCs busy
        BT = int(min(bt, B))
        grid = (pl.cdiv(B, BT),)              # ragged last block handled by Pallas

        # Grid-invariant weights keep default buffering for lowering safety;
        # their (double-buffered) footprint is already charged to the budget.
        full = lambda shape: pl.BlockSpec(shape, lambda b: (0,) * len(shape))
        out_pad = pl.pallas_call(
            _sentiment_attn_kernel,
            out_shape=jax.ShapeDtypeStruct((B, Sp, Cp), out_dtype),
            grid_spec=pltpu.PrefetchScalarGridSpec(
                num_scalar_prefetch=0,
                grid=grid,
                in_specs=[
                    pl.BlockSpec((BT, Sp, D), lambda b: (b, 0, 0)),  # features
                    full((Sp, 1)),    # softmax mask
                    full((D, H)),     # w1
                    full((1, H)),     # b1
                    full((1, H)),     # w2 (row)
                    full((1, 1)),     # b2
                    full((D, Cp)),    # wc (padded)
                    full((1, Cp)),    # bc (padded)
                ],
                out_specs=pl.BlockSpec((BT, Sp, Cp), lambda b: (b, 0, 0)),
            ),
            compiler_params=pltpu.CompilerParams(
                dimension_semantics=("parallel",),
                vmem_limit_bytes=int(vmem_limit)),
        )(x, smask, w1, b1, w2_row, b2, wc_pad, bc_pad)
        return out_pad[:, :S, :C]

    # ---- use_attention=False: flatten to (B*S, D), row-tiled matmul, cdiv grid
    # (no wrapper-side padding pass over the activations).
    R = B * S
    x2 = features.reshape(R, D)
    weight_bytes = 2 * isz * (D * Cp + Cp)
    per_row = 2 * D * isz + 2 * Cp * isz + 4 * Cp
    budget = max(8 * per_row, vmem_limit - weight_bytes - (2 << 20))
    tm = max(8, (budget // per_row) // 8 * 8)
    tm = min(tm, m_cap)
    tm = min(tm, _round_up(-(-R // 2), 8))    # >=2 grid steps when possible (v7x)
    TM = int(max(8, min(tm, _round_up(R, 8))))
    grid = (pl.cdiv(R, TM),)

    out2 = pl.pallas_call(
        _sentiment_plain_kernel,
        out_shape=jax.ShapeDtypeStruct((R, Cp), out_dtype),
        grid_spec=pltpu.PrefetchScalarGridSpec(
            num_scalar_prefetch=0,
            grid=grid,
            in_specs=[
                pl.BlockSpec((TM, D), lambda i: (i, 0)),
                pl.BlockSpec((D, Cp), lambda i: (0, 0)),
                pl.BlockSpec((1, Cp), lambda i: (0, 0)),
            ],
            out_specs=pl.BlockSpec((TM, Cp), lambda i: (i, 0)),
        ),
        compiler_params=pltpu.CompilerParams(
            dimension_semantics=("parallel",),
            vmem_limit_bytes=int(vmem_limit)),
    )(x2, wc_pad, bc_pad)
    return out2[:, :C].reshape(B, S, C)


# ---------------------------------------------------------------------------
# Deterministic parameter init + pure-JAX reference
# ---------------------------------------------------------------------------
def init_params(key, input_dim, num_classes, use_attention):
    ks = jax.random.split(key, 6)
    scale = 0.05
    p = {
        "wc": scale * jax.random.normal(ks[0], (input_dim, num_classes), jnp.float32),
        "bc": scale * jax.random.normal(ks[1], (1, num_classes), jnp.float32),
    }
    if use_attention:
        hid = input_dim // 2
        p["w1"] = scale * jax.random.normal(ks[2], (input_dim, hid), jnp.float32)
        p["b1"] = scale * jax.random.normal(ks[3], (1, hid), jnp.float32)
        p["w2"] = scale * jax.random.normal(ks[4], (hid, 1), jnp.float32)
        p["b2"] = scale * jax.random.normal(ks[5], (1, 1), jnp.float32)
    return p


def sentiment_head_ref(features, params, *, use_attention):
    pr = jax.lax.Precision.HIGHEST
    if use_attention:
        h = jnp.tanh(jnp.matmul(features, params["w1"], precision=pr) + params["b1"])
        scores = jnp.matmul(h, params["w2"], precision=pr) + params["b2"]
        attn = jax.nn.softmax(scores, axis=1)             # softmax over dim=1
        features = attn * features
    return jnp.matmul(features, params["wc"], precision=pr) + params["bc"]


# ---------------------------------------------------------------------------
if __name__ == "__main__":
    B, S, D, C = 2, 8, 32, 4
    key = jax.random.PRNGKey(0)
    kx, kp = jax.random.split(key)
    features = jax.random.normal(kx, (B, S, D), jnp.float32)

    # use_attention=True exercises the full path (MLP + softmax + folded scaling)
    params = init_params(kp, D, C, use_attention=True)

    out = jax.block_until_ready(sentiment_head(features, params, use_attention=True))
    ref = sentiment_head_ref(features, params, use_attention=True)
    assert out.shape == (B, S, C)
    assert jnp.allclose(out, ref, atol=1e-4, rtol=1e-4), "attention path mismatch"

    out2 = jax.block_until_ready(
        sentiment_head(features, params, use_attention=False))
    ref2 = sentiment_head_ref(features, params, use_attention=False)
    assert jnp.allclose(out2, ref2, atol=1e-4, rtol=1e-4), "plain path mismatch"

    print("KERNEL_OK")
</pallas_src>

<mosaic_0001>
module attributes {stable_mosaic.version = 11 : i64} {
  func.func @_sentiment_attn_kernel(%arg0: i32, %arg1: memref<1x8x32xf32, #tpu.memory_space<vmem>>, %arg2: memref<8x1xf32, #tpu.memory_space<vmem>>, %arg3: memref<32x16xf32, #tpu.memory_space<vmem>>, %arg4: memref<1x16xf32, #tpu.memory_space<vmem>>, %arg5: memref<1x16xf32, #tpu.memory_space<vmem>>, %arg6: memref<1x1xf32, #tpu.memory_space<vmem>>, %arg7: memref<32x128xf32, #tpu.memory_space<vmem>>, %arg8: memref<1x128xf32, #tpu.memory_space<vmem>>, %arg9: memref<1x8x128xf32, #tpu.memory_space<vmem>>) attributes {dimension_semantics = [#tpu.dimension_semantics<parallel>], iteration_bounds = array<i64: 2>, scalar_prefetch = 0 : i64, scratch_operands = 0 : i64, tpu.core_type = #tpu.core_type<tc>, window_params = [{transform_indices = @transform_0, window_bounds = array<i64: 1, 8, 32>}, {pipeline_mode = #tpu.pipeline_mode<synchronous>, transform_indices = @transform_1, window_bounds = array<i64: 8, 1>}, {pipeline_mode = #tpu.pipeline_mode<synchronous>, transform_indices = @transform_2, window_bounds = array<i64: 32, 16>}, {pipeline_mode = #tpu.pipeline_mode<synchronous>, transform_indices = @transform_3, window_bounds = array<i64: 1, 16>}, {pipeline_mode = #tpu.pipeline_mode<synchronous>, transform_indices = @transform_4, window_bounds = array<i64: 1, 16>}, {pipeline_mode = #tpu.pipeline_mode<synchronous>, transform_indices = @transform_5, window_bounds = array<i64: 1, 1>}, {pipeline_mode = #tpu.pipeline_mode<synchronous>, transform_indices = @transform_6, window_bounds = array<i64: 32, 128>}, {pipeline_mode = #tpu.pipeline_mode<synchronous>, transform_indices = @transform_7, window_bounds = array<i64: 1, 128>}, {transform_indices = @transform_8, window_bounds = array<i64: 1, 8, 128>}]} {
    %c0 = arith.constant 0 : index
    %c0_0 = arith.constant 0 : index
    %c0_1 = arith.constant 0 : index
    %0 = vector.load %arg1[%c0, %c0_0, %c0_1] : memref<1x8x32xf32, #tpu.memory_space<vmem>>, vector<1x8x32xf32>
    %1 = vector.shape_cast %0 : vector<1x8x32xf32> to vector<8x32xf32>
    %c0_2 = arith.constant 0 : index
    %c0_3 = arith.constant 0 : index
    %2 = vector.load %arg3[%c0_2, %c0_3] : memref<32x16xf32, #tpu.memory_space<vmem>>, vector<32x16xf32>
    %cst = arith.constant dense<0.000000e+00> : vector<8x16xf32>
    %3 = tpu.matmul %1, %2, %cst {dimension_numbers = #tpu.dot_dimension_numbers<[1], [0], [0], [1], [0, 0, 1, 1], [], []>} : vector<8x32xf32>, vector<32x16xf32>, vector<8x16xf32> -> vector<8x16xf32>
    %c0_4 = arith.constant 0 : index
    %c0_5 = arith.constant 0 : index
    %4 = vector.load %arg4[%c0_4, %c0_5] : memref<1x16xf32, #tpu.memory_space<vmem>>, vector<1x16xf32>
    %5 = vector.broadcast %4 : vector<1x16xf32> to vector<8x16xf32>
    %6 = arith.addf %3, %5 : vector<8x16xf32>
    %7 = math.tanh %6 : vector<8x16xf32>
    %8 = vector.shape_cast %7 : vector<8x16xf32> to vector<1x8x16xf32>
    %c0_6 = arith.constant 0 : index
    %c0_7 = arith.constant 0 : index
    %9 = vector.load %arg5[%c0_6, %c0_7] : memref<1x16xf32, #tpu.memory_space<vmem>>, vector<1x16xf32>
    %10 = vector.shape_cast %9 : vector<1x16xf32> to vector<1x1x16xf32>
    %11 = vector.broadcast %10 : vector<1x1x16xf32> to vector<1x8x16xf32>
    %12 = arith.mulf %8, %11 : vector<1x8x16xf32>
    %cst_8 = arith.constant dense<0.000000e+00> : vector<1x8xf32>
    %13 = vector.multi_reduction <add>, %12, %cst_8 [2] : vector<1x8x16xf32> to vector<1x8xf32>
    %14 = vector.shape_cast %13 : vector<1x8xf32> to vector<1x8x1xf32>
    %c0_9 = arith.constant 0 : index
    %c0_10 = arith.constant 0 : index
    %15 = vector.load %arg6[%c0_9, %c0_10] : memref<1x1xf32, #tpu.memory_space<vmem>>, vector<1x1xf32>
    %16 = vector.shape_cast %15 : vector<1x1xf32> to vector<1x1x1xf32>
    %17 = vector.broadcast %16 : vector<1x1x1xf32> to vector<1x8x1xf32>
    %18 = arith.addf %14, %17 : vector<1x8x1xf32>
    %c0_11 = arith.constant 0 : index
    %c0_12 = arith.constant 0 : index
    %19 = vector.load %arg2[%c0_11, %c0_12] : memref<8x1xf32, #tpu.memory_space<vmem>>, vector<8x1xf32>
    %20 = vector.shape_cast %19 : vector<8x1xf32> to vector<1x8x1xf32>
    %21 = arith.addf %18, %20 : vector<1x8x1xf32>
    %cst_13 = arith.constant dense<0xFF800000> : vector<1x1xf32>
    %22 = vector.multi_reduction <maximumf>, %21, %cst_13 [1] : vector<1x8x1xf32> to vector<1x1xf32>
    %23 = vector.shape_cast %22 : vector<1x1xf32> to vector<1x1x1xf32>
    %24 = vector.broadcast %23 : vector<1x1x1xf32> to vector<1x8x1xf32>
    %25 = arith.subf %21, %24 : vector<1x8x1xf32>
    %26 = math.exp %25 : vector<1x8x1xf32>
    %cst_14 = arith.constant dense<0.000000e+00> : vector<1x1xf32>
    %27 = vector.multi_reduction <add>, %26, %cst_14 [1] : vector<1x8x1xf32> to vector<1x1xf32>
    %28 = vector.shape_cast %27 : vector<1x1xf32> to vector<1x1x1xf32>
    %29 = vector.broadcast %28 : vector<1x1x1xf32> to vector<1x8x1xf32>
    %30 = arith.divf %26, %29 : vector<1x8x1xf32>
    %c0_15 = arith.constant 0 : index
    %c0_16 = arith.constant 0 : index
    %31 = vector.load %arg7[%c0_15, %c0_16] : memref<32x128xf32, #tpu.memory_space<vmem>>, vector<32x128xf32>
    %cst_17 = arith.constant dense<0.000000e+00> : vector<8x128xf32>
    %32 = tpu.matmul %1, %31, %cst_17 {dimension_numbers = #tpu.dot_dimension_numbers<[1], [0], [0], [1], [0, 0, 1, 1], [], []>} : vector<8x32xf32>, vector<32x128xf32>, vector<8x128xf32> -> vector<8x128xf32>
    %33 = vector.shape_cast %32 : vector<8x128xf32> to vector<1x8x128xf32>
    %34 = vector.broadcast %30 : vector<1x8x1xf32> to vector<1x8x128xf32>
    %35 = arith.mulf %34, %33 : vector<1x8x128xf32>
    %c0_18 = arith.constant 0 : index
    %c0_19 = arith.constant 0 : index
    %36 = vector.load %arg8[%c0_18, %c0_19] : memref<1x128xf32, #tpu.memory_space<vmem>>, vector<1x128xf32>
    %37 = vector.shape_cast %36 : vector<1x128xf32> to vector<1x1x128xf32>
    %38 = vector.broadcast %37 : vector<1x1x128xf32> to vector<1x8x128xf32>
    %39 = arith.addf %35, %38 : vector<1x8x128xf32>
    %c0_20 = arith.constant 0 : index
    %c0_21 = arith.constant 0 : index
    %c0_22 = arith.constant 0 : index
    %40 = vector.load %arg9[%c0_20, %c0_21, %c0_22] : memref<1x8x128xf32, #tpu.memory_space<vmem>>, vector<1x8x128xf32>
    tpu.vector_store %arg9[%c0_20, %c0_21, %c0_22], %39 {strides = array<i32>} : memref<1x8x128xf32, #tpu.memory_space<vmem>>, vector<1x8x128xf32>,
    return
  }
  func.func @transform_0(%arg0: i32) -> (i32, i32, i32) {
    %c0_i32 = arith.constant 0 : i32
    %c0_i32_0 = arith.constant 0 : i32
    %c0_i32_1 = arith.constant 0 : i32
    return %arg0, %c0_i32, %c0_i32_0 : i32, i32, i32
  }
  func.func @transform_1(%arg0: i32) -> (i32, i32) {
    %c0_i32 = arith.constant 0 : i32
    %c0_i32_0 = arith.constant 0 : i32
    %c0_i32_1 = arith.constant 0 : i32
    return %c0_i32, %c0_i32_0 : i32, i32
  }
  func.func @transform_2(%arg0: i32) -> (i32, i32) {
    %c0_i32 = arith.constant 0 : i32
    %c0_i32_0 = arith.constant 0 : i32
    %c0_i32_1 = arith.constant 0 : i32
    return %c0_i32, %c0_i32_0 : i32, i32
  }
  func.func @transform_3(%arg0: i32) -> (i32, i32) {
    %c0_i32 = arith.constant 0 : i32
    %c0_i32_0 = arith.constant 0 : i32
    %c0_i32_1 = arith.constant 0 : i32
    return %c0_i32, %c0_i32_0 : i32, i32
  }
  func.func @transform_4(%arg0: i32) -> (i32, i32) {
    %c0_i32 = arith.constant 0 : i32
    %c0_i32_0 = arith.constant 0 : i32
    %c0_i32_1 = arith.constant 0 : i32
    return %c0_i32, %c0_i32_0 : i32, i32
  }
  func.func @transform_5(%arg0: i32) -> (i32, i32) {
    %c0_i32 = arith.constant 0 : i32
    %c0_i32_0 = arith.constant 0 : i32
    %c0_i32_1 = arith.constant 0 : i32
    return %c0_i32, %c0_i32_0 : i32, i32
  }
  func.func @transform_6(%arg0: i32) -> (i32, i32) {
    %c0_i32 = arith.constant 0 : i32
    %c0_i32_0 = arith.constant 0 : i32
    %c0_i32_1 = arith.constant 0 : i32
    return %c0_i32, %c0_i32_0 : i32, i32
  }
  func.func @transform_7(%arg0: i32) -> (i32, i32) {
    %c0_i32 = arith.constant 0 : i32
    %c0_i32_0 = arith.constant 0 : i32
    %c0_i32_1 = arith.constant 0 : i32
    return %c0_i32, %c0_i32_0 : i32, i32
  }
  func.func @transform_8(%arg0: i32) -> (i32, i32, i32) {
    %c0_i32 = arith.constant 0 : i32
    %c0_i32_0 = arith.constant 0 : i32
    %c0_i32_1 = arith.constant 0 : i32
    return %arg0, %c0_i32, %c0_i32_0 : i32, i32, i32
  }
}

</mosaic_0001>

<llo_original>
// kernel: tpu_custom_call.1
$region0: #{tpu_custom_call.1}
  #allocation0 [shape = 'u32[]', space=smem, size = 0x4, offset = 0x4, fixed_abs, tag = 'smem constant byte address 0x4 - core index']
  #allocation1 [shape = 'u32[72,128]{1,0:T(1,128)}', space=vmem, size = 0x9000, scoped, tag = 'internal scratch']
  #allocation2 [shape = 'f32[1,1]{1,0:T(1,128)S(1)}', space=vmem, size = 0x200, scoped, tag = 'scoped memory for tpu_custom_call.1']
  %s0 = inlined_call_operand.vmem [shape: f32[2,8,32], index: 0, kind: input, shape index: {}]
  %s1 = inlined_call_operand.vmem [shape: f32[8,1], index: 1, kind: input, shape index: {}]
  %s2 = inlined_call_operand.vmem [shape: f32[32,16], index: 2, kind: input, shape index: {}]
  %s3 = inlined_call_operand.vmem [shape: f32[1,16], index: 3, kind: input, shape index: {}]
  %s4 = inlined_call_operand.vmem [shape: f32[1,16], index: 4, kind: input, shape index: {}]
  %s5 = inlined_call_operand.<no memory space> [shape: f32[1,1], index: 5, kind: input, shape index: {}]
  %s6 = inlined_call_operand.vmem [shape: f32[32,128], index: 6, kind: input, shape index: {}]
  %s7 = inlined_call_operand.vmem [shape: f32[1,128], index: 7, kind: input, shape index: {}]
  %s8 = inlined_call_operand.hbm [shape: f32[2,8,128], index: 8, kind: output, shape index: {}]
  %s9 = sld [smem:[#allocation0]]
  $region65: #{tpu_custom_call.1} parent=0
    _
  %s11 = ssub.s32 1, %s9
  %s12 = scalar_select 0, %s11, %s9
  %v13 = vstv %s5
  %14 = vst [vmem:[#allocation2] sm:$0x1] %v13
  $region1: #{tpu_custom_call.1} parent=0
    #allocation3 [shape = 'u8[8192]{0}', space=vmem, size = 0x2000, scoped, tag = 'output window, operand 0']
    #allocation4 [shape = 's32[2]{0}', space=sflag, size = 0x8, scoped, tag = 'scoped memory for tpu_custom_call.1']
    %15 = vsyncpa [#allocation4], 0
    %s16 = scalar_lea.sflag [#allocation4], 1
    %17 = vsyncpa %s16, 0
    loop: start=0, step=1, limit=4
    $region2: #{tpu_custom_call.1} parent=1 // loop_pre_header
      _
    $region3: #{tpu_custom_call.1} parent=1 // loop_header
      %s19 = sphi 0, %s23
      %p20 = scmp.ge.s32.totalorder %s19, 4
      %s29 = sphi 0, %s31
      %s32 = sphi 0, %s29
      %s33 = sphi 0, %s32
      %s49 = sphi 0, %s33
      %s53 = sphi 0, %s53
      %s55 = sphi 0, %s53
      %s56 = sphi 0, %s55
      %s70 = sphi 0, %s56
      %s74 = sphi 0, %s74
      %s76 = sphi 0, %s74
      %s77 = sphi 0, %s76
      %s91 = sphi 0, %s77
      %s95 = sphi 0, %s95
      %s97 = sphi 0, %s95
      %s98 = sphi 0, %s97
      %s112 = sphi 0, %s98
      %s116 = sphi 0, %s116
      %s118 = sphi 0, %s116
      %s119 = sphi 0, %s118
      %s133 = sphi 0, %s119
      %s137 = sphi 0, %s137
      %s139 = sphi 0, %s137
      %s140 = sphi 0, %s139
      %s154 = sphi 0, %s140
      %s158 = sphi 0, %s158
      %s160 = sphi 0, %s158
      %s161 = sphi 0, %s160
      %s175 = sphi 0, %s161
      %s179 = sphi 0, %s179
      %s181 = sphi 0, %s179
      %s182 = sphi 0, %s181
      %s196 = sphi 0, %s182
      %s202 = sphi 0, %s204
      %s205 = sphi 0, %s202
      %s206 = sphi 0, %s205
      %s222 = sphi 0, %s206
    $region4: #{tpu_custom_call.1} parent=1 // loop_header_branch
      %22 = sbr.rel (%p20) target = $region8
    $region5: #{tpu_custom_call.1} parent=1 // loop_body
      %s24 = ssub.s32 %s19, 1
      %s25 = ssub.s32 %s19, 2
      %s26 = sadd.s32 %s19, 1
      %s27 = ssub.s32 %s19, %s26
      %p28 = scmp.eq.s32.totalorder %s27, 0
      %s30 = sadd.s32 %s29, 1
      %s31 = scalar_select %p28, %s29, %s30
      %p34 = pneg %p28
      %p35 = scmp.eq.s32.totalorder %s19, 1
      %p36 = por %p34, %p35
      %p37 = scmp.ne.s32.totalorder %s29, %s32
      %p38 = scmp.eq.s32.totalorder %s19, 0
      %p39 = por %p37, %p38
      %p40 = scmp.ne.s32.totalorder %s29, %s32
      %p41 = scmp.eq.s32.totalorder %s24, 1
      %p42 = por %p40, %p41
      %p43 = scmp.ne.s32.totalorder %s32, %s33
      %p44 = scmp.eq.s32.totalorder %s24, 0
      %p45 = por %p43, %p44
      %p46 = scmp.ne.s32.totalorder %s32, %s33
      %p47 = scmp.eq.s32.totalorder %s25, 1
      %p48 = por %p46, %p47
      %p50 = scmp.ne.s32.totalorder %s33, %s49
      %p51 = scmp.eq.s32.totalorder %s25, 0
      %p52 = por %p50, %p51
      %s54 = sadd.s32 %s53, 1
      %p57 = scmp.eq.s32.totalorder %s19, 1
      %p58 = scmp.ne.s32.totalorder %s53, %s55
      %p59 = scmp.eq.s32.totalorder %s19, 0
      %p60 = por %p58, %p59
      %p61 = scmp.ne.s32.totalorder %s53, %s55
      %p62 = scmp.eq.s32.totalorder %s24, 1
      %p63 = por %p61, %p62
      %p64 = scmp.ne.s32.totalorder %s55, %s56
      %p65 = scmp.eq.s32.totalorder %s24, 0
      %p66 = por %p64, %p65
      %p67 = scmp.ne.s32.totalorder %s55, %s56
      %p68 = scmp.eq.s32.totalorder %s25, 1
      %p69 = por %p67, %p68
      %p71 = scmp.ne.s32.totalorder %s56, %s70
      %p72 = scmp.eq.s32.totalorder %s25, 0
      %p73 = por %p71, %p72
      %s75 = sadd.s32 %s74, 1
      %p78 = scmp.eq.s32.totalorder %s19, 1
      %p79 = scmp.ne.s32.totalorder %s74, %s76
      %p80 = scmp.eq.s32.totalorder %s19, 0
      %p81 = por %p79, %p80
      %p82 = scmp.ne.s32.totalorder %s74, %s76
      %p83 = scmp.eq.s32.totalorder %s24, 1
      %p84 = por %p82, %p83
      %p85 = scmp.ne.s32.totalorder %s76, %s77
      %p86 = scmp.eq.s32.totalorder %s24, 0
      %p87 = por %p85, %p86
      %p88 = scmp.ne.s32.totalorder %s76, %s77
      %p89 = scmp.eq.s32.totalorder %s25, 1
      %p90 = por %p88, %p89
      %p92 = scmp.ne.s32.totalorder %s77, %s91
      %p93 = scmp.eq.s32.totalorder %s25, 0
      %p94 = por %p92, %p93
      %s96 = sadd.s32 %s95, 1
      %p99 = scmp.eq.s32.totalorder %s19, 1
      %p100 = scmp.ne.s32.totalorder %s95, %s97
      %p101 = scmp.eq.s32.totalorder %s19, 0
      %p102 = por %p100, %p101
      %p103 = scmp.ne.s32.totalorder %s95, %s97
      %p104 = scmp.eq.s32.totalorder %s24, 1
      %p105 = por %p103, %p104
      %p106 = scmp.ne.s32.totalorder %s97, %s98
      %p107 = scmp.eq.s32.totalorder %s24, 0
      %p108 = por %p106, %p107
      %p109 = scmp.ne.s32.totalorder %s97, %s98
      %p110 = scmp.eq.s32.totalorder %s25, 1
      %p111 = por %p109, %p110
      %p113 = scmp.ne.s32.totalorder %s98, %s112
      %p114 = scmp.eq.s32.totalorder %s25, 0
      %p115 = por %p113, %p114
      %s117 = sadd.s32 %s116, 1
      %p120 = scmp.eq.s32.totalorder %s19, 1
      %p121 = scmp.ne.s32.totalorder %s116, %s118
      %p122 = scmp.eq.s32.totalorder %s19, 0
      %p123 = por %p121, %p122
      %p124 = scmp.ne.s32.totalorder %s116, %s118
      %p125 = scmp.eq.s32.totalorder %s24, 1
      %p126 = por %p124, %p125
      %p127 = scmp.ne.s32.totalorder %s118, %s119
      %p128 = scmp.eq.s32.totalorder %s24, 0
      %p129 = por %p127, %p128
      %p130 = scmp.ne.s32.totalorder %s118, %s119
      %p131 = scmp.eq.s32.totalorder %s25, 1
      %p132 = por %p130, %p131
      %p134 = scmp.ne.s32.totalorder %s119, %s133
      %p135 = scmp.eq.s32.totalorder %s25, 0
      %p136 = por %p134, %p135
      %s138 = sadd.s32 %s137, 1
      %p141 = scmp.eq.s32.totalorder %s19, 1
      %p142 = scmp.ne.s32.totalorder %s137, %s139
      %p143 = scmp.eq.s32.totalorder %s19, 0
      %p144 = por %p142, %p143
      %p145 = scmp.ne.s32.totalorder %s137, %s139
      %p146 = scmp.eq.s32.totalorder %s24, 1
      %p147 = por %p145, %p146
      %p148 = scmp.ne.s32.totalorder %s139, %s140
      %p149 = scmp.eq.s32.totalorder %s24, 0
      %p150 = por %p148, %p149
      %p151 = scmp.ne.s32.totalorder %s139, %s140
      %p152 = scmp.eq.s32.totalorder %s25, 1
      %p153 = por %p151, %p152
      %p155 = scmp.ne.s32.totalorder %s140, %s154
      %p156 = scmp.eq.s32.totalorder %s25, 0
      %p157 = por %p155, %p156
      %s159 = sadd.s32 %s158, 1
      %p162 = scmp.eq.s32.totalorder %s19, 1
      %p163 = scmp.ne.s32.totalorder %s158, %s160
      %p164 = scmp.eq.s32.totalorder %s19, 0
      %p165 = por %p163, %p164
      %p166 = scmp.ne.s32.totalorder %s158, %s160
      %p167 = scmp.eq.s32.totalorder %s24, 1
      %p168 = por %p166, %p167
      %p169 = scmp.ne.s32.totalorder %s160, %s161
      %p170 = scmp.eq.s32.totalorder %s24, 0
      %p171 = por %p169, %p170
      %p172 = scmp.ne.s32.totalorder %s160, %s161
      %p173 = scmp.eq.s32.totalorder %s25, 1
      %p174 = por %p172, %p173
      %p176 = scmp.ne.s32.totalorder %s161, %s175
      %p177 = scmp.eq.s32.totalorder %s25, 0
      %p178 = por %p176, %p177
      %s180 = sadd.s32 %s179, 1
      %p183 = scmp.eq.s32.totalorder %s19, 1
      %p184 = scmp.ne.s32.totalorder %s179, %s181
      %p185 = scmp.eq.s32.totalorder %s19, 0
      %p186 = por %p184, %p185
      %p187 = scmp.ne.s32.totalorder %s179, %s181
      %p188 = scmp.eq.s32.totalorder %s24, 1
      %p189 = por %p187, %p188
      %p190 = scmp.ne.s32.totalorder %s181, %s182
      %p191 = scmp.eq.s32.totalorder %s24, 0
      %p192 = por %p190, %p191
      %p193 = scmp.ne.s32.totalorder %s181, %s182
      %p194 = scmp.eq.s32.totalorder %s25, 1
      %p195 = por %p193, %p194
      %p197 = scmp.ne.s32.totalorder %s182, %s196
      %p198 = scmp.eq.s32.totalorder %s25, 0
      %p199 = por %p197, %p198
      %s200 = ssub.s32 %s19, %s26
      %p201 = scmp.eq.s32.totalorder %s200, 0
      %s203 = sadd.s32 %s202, 1
      %s204 = scalar_select %p201, %s202, %s203
      %p207 = pneg %p201
      %p208 = scmp.eq.s32.totalorder %s19, 1
      %p209 = por %p207, %p208
      %p210 = scmp.ne.s32.totalorder %s202, %s205
      %p211 = scmp.eq.s32.totalorder %s19, 0
      %p212 = por %p210, %p211
      %p213 = scmp.ne.s32.totalorder %s202, %s205
      %p214 = scmp.eq.s32.totalorder %s24, 1
      %p215 = por %p213, %p214
      %p216 = scmp.ne.s32.totalorder %s205, %s206
      %p217 = scmp.eq.s32.totalorder %s24, 0
      %p218 = por %p216, %p217
      %p219 = scmp.ne.s32.totalorder %s205, %s206
      %p220 = scmp.eq.s32.totalorder %s25, 1
      %p221 = por %p219, %p220
      %p223 = scmp.ne.s32.totalorder %s206, %s222
      %p224 = scmp.eq.s32.totalorder %s25, 0
      %p225 = por %p223, %p224
      %p226 = scmp.le.s32.totalorder 1, %s19
      %p227 = scmp.lt.s32.totalorder %s19, 3
      %p228 = pnand %p226, %p227
      %p229 = pneg %p228
      // Predicated region
      $region9: #{tpu_custom_call.1} parent=5 // pred_check
        _
      $region10: #{tpu_custom_call.1} parent=5 // pred_check_branch
        %231 = sbr.rel (%p228) target = $region12
      $region11: #{tpu_custom_call.1} parent=5 // pred_region
        %s232 = ssub.s32 %s19, 1
        // Predicated region
        $region13: #{tpu_custom_call.1} parent=11 // pred_check
          %p233 = pneg %p66
        $region14: #{tpu_custom_call.1} parent=11 // pred_check_branch
          %235 = sbr.rel (%p233) target = $region16
        $region15: #{tpu_custom_call.1} parent=11 // pred_region
          _
        $region16: #{tpu_custom_call.1} parent=11 // pred_fallthru
          _
        // Predicated region
        $region17: #{tpu_custom_call.1} parent=11 // pred_check
          %p236 = pneg %p87
        $region18: #{tpu_custom_call.1} parent=11 // pred_check_branch
          %238 = sbr.rel (%p236) target = $region20
        $region19: #{tpu_custom_call.1} parent=11 // pred_region
          _
        $region20: #{tpu_custom_call.1} parent=11 // pred_fallthru
          _
        // Predicated region
        $region21: #{tpu_custom_call.1} parent=11 // pred_check
          %p239 = pneg %p108
        $region22: #{tpu_custom_call.1} parent=11 // pred_check_branch
          %241 = sbr.rel (%p239) target = $region24
        $region23: #{tpu_custom_call.1} parent=11 // pred_region
          _
        $region24: #{tpu_custom_call.1} parent=11 // pred_fallthru
          _
        // Predicated region
        $region25: #{tpu_custom_call.1} parent=11 // pred_check
          %p242 = pneg %p129
        $region26: #{tpu_custom_call.1} parent=11 // pred_check_branch
          %244 = sbr.rel (%p242) target = $region28
        $region27: #{tpu_custom_call.1} parent=11 // pred_region
          _
        $region28: #{tpu_custom_call.1} parent=11 // pred_fallthru
          _
        // Predicated region
        $region29: #{tpu_custom_call.1} parent=11 // pred_check
          %p245 = pneg %p150
        $region30: #{tpu_custom_call.1} parent=11 // pred_check_branch
          %247 = sbr.rel (%p245) target = $region32
        $region31: #{tpu_custom_call.1} parent=11 // pred_region
          _
        $region32: #{tpu_custom_call.1} parent=11 // pred_fallthru
          _
        // Predicated region
        $region33: #{tpu_custom_call.1} parent=11 // pred_check
          %p248 = pneg %p171
        $region34: #{tpu_custom_call.1} parent=11 // pred_check_branch
          %250 = sbr.rel (%p248) target = $region36
        $region35: #{tpu_custom_call.1} parent=11 // pred_region
          _
        $region36: #{tpu_custom_call.1} parent=11 // pred_fallthru
          _
        // Predicated region
        $region37: #{tpu_custom_call.1} parent=11 // pred_check
          %p251 = pneg %p192
        $region38: #{tpu_custom_call.1} parent=11 // pred_check_branch
          %253 = sbr.rel (%p251) target = $region40
        $region39: #{tpu_custom_call.1} parent=11 // pred_region
          _
        $region40: #{tpu_custom_call.1} parent=11 // pred_fallthru
          _
      $region12: #{tpu_custom_call.1} parent=5 // pred_fallthru
        _
      %p254 = scmp.lt.s32.totalorder %s19, 2
      // Predicated region
      $region41: #{tpu_custom_call.1} parent=5 // pred_check
        %p255 = pneg %p254
      $region42: #{tpu_custom_call.1} parent=5 // pred_check_branch
        %257 = sbr.rel (%p255) target = $region44
      $region43: #{tpu_custom_call.1} parent=5 // pred_region
        // Predicated region
        $region45: #{tpu_custom_call.1} parent=43 // pred_check
          %p258 = pneg %p39
        $region46: #{tpu_custom_call.1} parent=43 // pred_check_branch
          %260 = sbr.rel (%p258) target = $region48
        $region47: #{tpu_custom_call.1} parent=43 // pred_region
          %p261 = scmp.lt.s32.totalorder %s19, 1
          %s262 = scalar_select %p261, %s19, 1
          %s263 = smul.addr %s262, 8
          %s264 = scalar_lea.vmem %s0, %s263
        $region48: #{tpu_custom_call.1} parent=43 // pred_fallthru
          _
      $region44: #{tpu_custom_call.1} parent=5 // pred_fallthru
        _
      %p265 = scmp.le.s32.totalorder 1, %s19
      %p266 = scmp.lt.s32.totalorder %s19, 3
      %p267 = pnand %p265, %p266
      %p268 = pneg %p267
      // Predicated region
      $region49: #{tpu_custom_call.1} parent=5 // pred_check
        _
      $region50: #{tpu_custom_call.1} parent=5 // pred_check_branch
        %270 = sbr.rel (%p267) target = $region52
      $region51: #{tpu_custom_call.1} parent=5 // pred_region
        %s271 = ssub.s32 %s19, 1
        %p272 = scmp.lt.s32.totalorder %s24, 1
        %s273 = scalar_select %p272, %s24, 1
        %s274 = smul.addr %s273, 8
        %s275 = scalar_lea.vmem %s0, %s274
        %p276 = pneg %p45
        %p277 = pneg %p42
        %p278 = pneg %p66
        %p279 = pneg %p63
        %p280 = pneg %p87
        %p281 = pneg %p84
        %p282 = pneg %p108
        %p283 = pneg %p105
        %p284 = pneg %p129
        %p285 = pneg %p126
        %p286 = pneg %p150
        %p287 = pneg %p147
        %p288 = pneg %p171
        %p289 = pneg %p168
        %p290 = pneg %p192
        %p291 = pneg %p189
        %p292 = pneg %p218
        %p293 = pneg %p215
        %s294 = sand.u32 %s205, 1
        %s295 = scalar_lea.sflag [#allocation4], %s294
        %s296 = sand.u32 %s205, 1
        %s297 = smul.addr %s296, 8
        %s298 = scalar_lea.vmem [#allocation3], %s297
        %p299 = scmp.lt.s32.totalorder %s24, 1
        %s300 = scalar_select %p299, %s24, 1
        %s301 = smul.addr %s300, 8
        %s302 = scalar_lea.vmem %s0, %s301
        %v303 = vld [vmem:[%s302] sm:$0xff]
        %v304 = vld [vmem:[%s2] sm:$0xff]
        %v305 = vld [vmem:[%s2 + $0x8] sm:$0xff]
        %v306 = vld [vmem:[%s2 + $0x10] sm:$0xff]
        %v307 = vld [vmem:[%s2 + $0x18] sm:$0xff]
        %v308 = vld [vmem:[%s3] sm:$0x1]
        %v310 = vperm.slane %v308, 0
        %vm312 = vcmask 261120
        %v314 = vsel %vm312, %v303, 0
        %316 = vmatpush.msra.mxu0 0.0
        %317 = vmatpush.msra.mxu0 0.0
        %318 = vmatpush.msra.mxu0 0.0
        %319 = vmatpush.msra.mxu0 0.0
        %320 = vmatpush.msra.mxu0 0.0
        %321 = vmatpush.msra.mxu0 0.0
        %322 = vmatpush.msra.mxu0 0.0
        %323 = vmatpush.msra.mxu0 0.0
        %324 = vmatpush.msra.mxu0 0.0
        %325 = vmatpush.msra.mxu0 0.0
        %326 = vmatpush.msra.mxu0 0.0
        %327 = vmatpush.msra.mxu0 0.0
        %328 = vmatpush.msra.mxu0 %v307
        %329 = vmatpush.msra.mxu0 %v306
        %330 = vmatpush.msra.mxu0 %v305
        %331 = vmatpush.msra.mxu0 %v304
        %332 = vmatmul.f32.gmra.mxu0 %v314
        %v333 = vpop.f32.mrf.mxu0
        %v334 = vadd.f32 %v310, %v333
        %335 = vdwg.mxu0
        %v336 = vtanh.pop %v334
        %v337 = vld [vmem:[%s4] sm:$0x1]
        %v339 = vperm.slane %v337, 0
        %v341 = vmul.f32 %v336, %v339
        %vm342 = vcmask 130048
        %v343 = vsel %vm342, %v341, 0.0
        %344 = vadd.xlane.f32.xlu0 %v343
        %v345 = vpop.xlane.xlu0 %344
        %v346 = vld [vmem:[#allocation2] sm:$0x1]
        %v348 = vperm.slane %v346, 0
        %v350 = vadd.f32 %v345, %v348
        %v351 = vld [vmem:[%s1] sm:$0xff]
        %v352 = vadd.f32 %v350, %v351
        %vm353 = vcmask 7168
        %v354 = vsel %vm353, %v352, -inf
        %v355 = vrot.slane %v354, 4
        %v356 = vmax.f32 %v354, %v355
        %v357 = vrot.slane %v356, 2
        %v358 = vmax.f32 %v356, %v357
        %v359 = vrot.slane %v358, 1
        %v360 = vmax.f32 %v358, %v359
        %v361 = vsub.f32 %v352, %v360
        %v362 = vmul.f32 %v361, 1.442695
        %v363 = vpow.pop %v362
        %v364 = vsel %vm353, %v363, 0.0
        %v365 = vrot.slane %v364, 4
        %v366 = vadd.f32 %v364, %v365
        %v367 = vrot.slane %v366, 2
        %v368 = vadd.f32 %v366, %v367
        %v369 = vrot.slane %v368, 1
        %v370 = vadd.f32 %v368, %v369
        %v371 = vrcp.pop %v370
        %v372 = vmul.f32 %v370, %v371
        %v373 = vsub.f32 1.0, %v372
        %v374 = vmul.f32 %v371, %v373
        %v375 = vadd.f32 %v371, %v374
        %vm376 = vweird.f32 %v370
        %vm377 = vweird.f32 %v371
        %vm378 = vmor %vm376, %vm377
        %v379 = vsel %vm378, %v371, %v375
        %v380 = vand.u32 2147483647, %v370
        %vm381 = vcmp.eq.f32.partialorder %v380, 8.507059e+37
        %v382 = vand.u32 %v370, 2147483648
        %v383 = vor.u32 1.1754944e-38, %v382
        %v384 = vsel %vm381, %v383, %v379
        %v385 = vmul.f32 %v363, %v384
        %v386 = vld [vmem:[%s6] sm:$0xff]
        %v387 = vld [vmem:[%s6 + $0x8] sm:$0xff]
        %v388 = vld [vmem:[%s6 + $0x10] sm:$0xff]
        %v389 = vld [vmem:[%s6 + $0x18] sm:$0xff]
        %390 = vmatpush.msra.mxu0 0.0
        %391 = vmatpush.msra.mxu0 0.0
        %392 = vmatpush.msra.mxu0 0.0
        %393 = vmatpush.msra.mxu0 0.0
        %394 = vmatpush.msra.mxu0 0.0
        %395 = vmatpush.msra.mxu0 0.0
        %396 = vmatpush.msra.mxu0 0.0
        %397 = vmatpush.msra.mxu0 0.0
        %398 = vmatpush.msra.mxu0 0.0
        %399 = vmatpush.msra.mxu0 0.0
        %400 = vmatpush.msra.mxu0 0.0
        %401 = vmatpush.msra.mxu0 0.0
        %402 = vmatpush.msra.mxu0 %v389
        %403 = vmatpush.msra.mxu0 %v388
        %404 = vmatpush.msra.mxu0 %v387
        %405 = vmatpush.msra.mxu0 %v386
        %406 = vmatmul.f32.gmra.mxu0 %v314
        %v407 = vpop.f32.mrf.mxu0
        %v408 = vadd.f32 0.0, %v407
        %409 = vdwg.mxu0
        %411 = vset.pattern.permute.xlu0 0
        %412 = vperm.xlu0 %411, %v385
        %v413 = vpop.permute.xlu0 %412
        %v415 = vmul.f32 %v413, %v408
        %v416 = vld [vmem:[%s7] sm:$0x1]
        %v418 = vperm.slane %v416, 0
        %v420 = vadd.f32 %v415, %v418
        %421 = vst [vmem:[%s298] sm:$0xff] %v420
        %s422 = sand.u32 %s205, 1
        %s423 = scalar_lea.sflag [#allocation4], %s422
        %s424 = sand.u32 %s205, 1
        %s425 = smul.addr %s424, 8
        %s426 = scalar_lea.vmem [#allocation3], %s425
        // Predicated region
        $region53: #{tpu_custom_call.1} parent=51 // pred_check
          %p427 = pneg %p215
        $region54: #{tpu_custom_call.1} parent=51 // pred_check_branch
          %429 = sbr.rel (%p427) target = $region56
        $region55: #{tpu_custom_call.1} parent=51 // pred_region
          %431 = vsyncadd %s423, 0
          %s432 = smul.addr %s24, 8
          %s433 = scalar_lea.hbm %s8, %s432
          %s435 = sshll.u32 %s426, 4
          %s436 = int_to_ptr.vmem [resolvable:$true] %s435
          %s437 = sshll.u32 %s433, 4
          %s438 = int_to_ptr.hbm [resolvable:$true] %s437
          %440 = dma.vmem_to_hbm [thread:$0]  %s436, 128, %s438, %s423
        $region56: #{tpu_custom_call.1} parent=51 // pred_fallthru
          _
      $region52: #{tpu_custom_call.1} parent=5 // pred_fallthru
        _
      %p441 = scmp.le.s32.totalorder 2, %s19
      // Predicated region
      $region57: #{tpu_custom_call.1} parent=5 // pred_check
        %p442 = pneg %p441
      $region58: #{tpu_custom_call.1} parent=5 // pred_check_branch
        %444 = sbr.rel (%p442) target = $region60
      $region59: #{tpu_custom_call.1} parent=5 // pred_region
        %s445 = ssub.s32 %s19, 2
        // Predicated region
        $region61: #{tpu_custom_call.1} parent=59 // pred_check
          %p446 = pneg %p221
        $region62: #{tpu_custom_call.1} parent=59 // pred_check_branch
          %448 = sbr.rel (%p446) target = $region64
        $region63: #{tpu_custom_call.1} parent=59 // pred_region
          %s449 = sand.u32 %s206, 1
          %s450 = scalar_lea.sflag [#allocation4], %s449
          %s451 = sand.u32 %s206, 1
          %s452 = smul.addr %s451, 8
          %s453 = scalar_lea.vmem [#allocation3], %s452
          %455 = dma.done %s450, 128
        $region64: #{tpu_custom_call.1} parent=59 // pred_fallthru
          _
      $region60: #{tpu_custom_call.1} parent=5 // pred_fallthru
        _
    $region6: #{tpu_custom_call.1} parent=1 // loop_footer
      %s23 = sadd.s32 1, %s19
    $region7: #{tpu_custom_call.1} parent=1 // loop_footer_branch
      %18 = sbr.rel target = $region3
    $region8: #{tpu_custom_call.1} parent=1 // loop_exit
      _
    %456 = vsyncpa [#allocation4], 1
    %s457 = scalar_lea.sflag [#allocation4], 1
    %458 = vsyncpa %s457, 1

</llo_original>
